<compile_context>
chip_gen: v7x
topology: tpu7x:2x2x1
jax: 0.10.0
libtpu: 0.0.40
codegen_flags: <defaults>
</compile_context>

<pallas_src>
import functools

import jax
import jax.numpy as jnp
from jax.experimental import pallas as pl
from jax.experimental.pallas import tpu as pltpu


def _round_up(x: int, m: int) -> int:
    return (x + m - 1) // m * m


@functools.lru_cache(maxsize=None)
def _vmem_budget_bytes() -> int:
    """Usable per-TensorCore VMEM budget with ~20% headroom for Mosaic scratch."""
    try:
        cap = int(pltpu.get_tpu_info().vmem_capacity_bytes)
        return max(32 << 20, int(cap * 0.8))
    except Exception:
        # Unknown chip: stay comfortably under v7x's 64 MiB/TC physical VMEM.
        return 48 << 20


def _vmem_footprint(tm, tk, Dh, Di, x_bytes, out_bytes, c_bytes):
    """Approximate VMEM bytes used by one grid step (incl. pipeline buffers)."""
    n_k = Di // tk
    w_buf = 1 if n_k == 1 else 2          # resident (single) vs streamed (double)
    fp = 2 * tm * Dh * x_bytes            # x tiles (double-buffered)
    fp += 2 * tm * Dh * out_bytes         # out tiles (double-buffered)
    fp += w_buf * Dh * tk * c_bytes       # w1 block(s)
    fp += w_buf * tk * Dh * c_bytes       # w2 block(s)
    fp += w_buf * 8 * tk * 4              # b1 (sublane-padded)
    fp += 8 * Dh * 4                      # b2
    fp += tm * Dh * 4                     # f32 accumulator scratch
    fp += tm * tk * (4 + c_bytes)         # h intermediate (f32 + cast copy)
    fp += tm * Dh * (4 + c_bytes)         # partial product + x-cast temporaries
    return fp


def _select_tiles(M, Dh, Di, x_bytes, out_bytes, c_bytes, block_m, budget):
    """Pick (tm, tk): token tile and d_inner split, sized to the VMEM budget."""
    assert block_m % 8 == 0, "block_m must be a multiple of 8"
    tm = _round_up(min(block_m, M), 16)   # 16: bf16 sublane packing
    tk = Di                               # weights fully resident when they fit

    def fits(tm_, tk_):
        return _vmem_footprint(tm_, tk_, Dh, Di,
                               x_bytes, out_bytes, c_bytes) <= budget

    # Prefer shrinking the token tile (keeps weights resident, fetched once)...
    while not fits(tm, tk) and tm > 256:
        tm = _round_up(tm // 2, 16)
    # ...then split d_inner (P3 reduction axis) when the weights are too big...
    while not fits(tm, tk) and tk >= 256 and (tk // 2) % 128 == 0:
        tk //= 2
    # ...and as a last resort shrink the token tile further.
    while not fits(tm, tk) and tm > 16:
        tm = max(16, _round_up(tm // 2, 16))
    return tm, tk


def _ffn_kernel(x_ref, w1_ref, b1_ref, w2_ref, b2_ref, o_ref, acc_ref):
    # x_ref:  (tm, Dh)  token tile, native input dtype (cast here, not in HBM)
    # w1_ref: (Dh, tk)  pre-transposed w_1.weight[:, :, 0].T slice (compute dtype)
    # b1_ref: (1,  tk)  f32
    # w2_ref: (tk, Dh)  pre-transposed w_2.weight[:, :, 0].T slice (compute dtype)
    # b2_ref: (1,  Dh)  f32
    # o_ref:  (tm, Dh)  output tile
    # acc_ref:(tm, Dh)  f32 accumulator across the d_inner (k) grid axis
    k = pl.program_id(1)

    xc = x_ref[...].astype(w1_ref.dtype)               # in-kernel cast
    h = jnp.dot(xc, w1_ref[...], preferred_element_type=jnp.float32)
    h = (h + b1_ref[...]).astype(w2_ref.dtype)         # f32 bias add, cast for MXU
    part = jnp.dot(h, w2_ref[...], preferred_element_type=jnp.float32)

    @pl.when(k == 0)
    def _():
        acc_ref[...] = part

    @pl.when(k > 0)
    def _():
        acc_ref[...] += part

    @pl.when(k == pl.num_programs(1) - 1)
    def _():
        o_ref[...] = (acc_ref[...] + b2_ref[...]).astype(o_ref.dtype)


def prepare_ffn_params(w1, b1, w2, b2, compute_dtype=jnp.bfloat16):
    """One-time parameter prep (do NOT call per forward pass).

    w1: (d_inner, d_hid) == torch w_1.weight[:, :, 0]
    w2: (d_hid, d_inner) == torch w_2.weight[:, :, 0]

    Pre-transposes the weights (no per-call HBM transpose) and zero-pads both
    hidden dims to multiples of 128 so every matmul / store is lane-dense.
    Zero padding is exact: padded input lanes are zero, padded inner channels
    get zero weight columns, padded output lanes are sliced off. Biases stay
    f32; weights are stored in the (default bf16) MXU compute dtype.
    """
    d_inner, d_hid = w1.shape
    Dh = _round_up(d_hid, 128)
    Di = _round_up(d_inner, 128)
    w1_t = jnp.pad(w1.T.astype(compute_dtype),
                   ((0, Dh - d_hid), (0, Di - d_inner)))          # (Dh, Di)
    w2_t = jnp.pad(w2.T.astype(compute_dtype),
                   ((0, Di - d_inner), (0, Dh - d_hid)))          # (Di, Dh)
    b1_p = jnp.pad(b1.astype(jnp.float32), (0, Di - d_inner)).reshape(1, Di)
    b2_p = jnp.pad(b2.astype(jnp.float32), (0, Dh - d_hid)).reshape(1, Dh)
    return w1_t, b1_p, w2_t, b2_p


@functools.partial(jax.jit, static_argnames=("block_m", "out_dtype"))
def positionwise_feed_forward(x, w1_t, b1_p, w2_t, b2_p, *,
                              block_m=1024, out_dtype=None):
    """x: (B, L, d_hid); params from prepare_ffn_params. Returns (B, L, d_hid)."""
    B, L, d_hid = x.shape
    Dh, Di = w1_t.shape
    o_dtype = jnp.dtype(x.dtype if out_dtype is None else out_dtype)

    M = B * L
    x_bytes = jnp.dtype(x.dtype).itemsize
    c_bytes = jnp.dtype(w1_t.dtype).itemsize
    o_bytes = o_dtype.itemsize

    budget = _vmem_budget_bytes()
    tm, tk = _select_tiles(M, Dh, Di, x_bytes, o_bytes, c_bytes, block_m, budget)
    M_pad = _round_up(M, tm)
    n_m, n_k = M_pad // tm, Di // tk

    # Pass x at its NATIVE dtype (cast happens per-tile in the kernel); pad
    # only when actually needed.
    x2d = x.reshape(M, d_hid)
    if M_pad != M or Dh != d_hid:
        x2d = jnp.pad(x2d, ((0, M_pad - M), (0, Dh - d_hid)))

    fp = _vmem_footprint(tm, tk, Dh, Di, x_bytes, o_bytes, c_bytes)
    vmem_limit = max(16 << 20, min(budget, int(fp * 1.3) + (2 << 20)))

    resident = pl.Buffered(buffer_count=1)     # constant operands: single buffer
    w_mode = resident if n_k == 1 else None    # stream (double-buffer) if K-split

    w_bytes_total = 2 * Dh * Di * c_bytes * (1 if n_k == 1 else n_m)
    cost = pl.CostEstimate(
        flops=4 * M_pad * Dh * Di,
        transcendentals=0,
        bytes_accessed=M_pad * Dh * (x_bytes + o_bytes) + w_bytes_total,
    )

    out2d = pl.pallas_call(
        _ffn_kernel,
        out_shape=jax.ShapeDtypeStruct((M_pad, Dh), o_dtype),
        grid_spec=pltpu.PrefetchScalarGridSpec(
            num_scalar_prefetch=0,
            grid=(n_m, n_k),
            in_specs=[
                pl.BlockSpec((tm, Dh), lambda i, k: (i, 0)),                    # x
                pl.BlockSpec((Dh, tk), lambda i, k: (0, k), pipeline_mode=w_mode),  # w1
                pl.BlockSpec((1, tk), lambda i, k: (0, k), pipeline_mode=w_mode),   # b1
                pl.BlockSpec((tk, Dh), lambda i, k: (k, 0), pipeline_mode=w_mode),  # w2
                pl.BlockSpec((1, Dh), lambda i, k: (0, 0), pipeline_mode=resident), # b2
            ],
            out_specs=pl.BlockSpec((tm, Dh), lambda i, k: (i, 0)),
            scratch_shapes=[pltpu.VMEM((tm, Dh), jnp.float32)],
        ),
        compiler_params=pltpu.CompilerParams(
            # Token rows independent -> shard across TensorCores; d_inner split
            # is a reduction -> arbitrary, innermost.
            dimension_semantics=("parallel", "arbitrary"),
            vmem_limit_bytes=vmem_limit,
        ),
        cost_estimate=cost,
    )(x2d, w1_t, b1_p, w2_t, b2_p)

    return out2d[:M, :d_hid].reshape(B, L, d_hid)


def reference(x, w1, b1, w2, b2, compute_dtype=jnp.float32):
    # Pure-JAX reference mimicking the PyTorch forward exactly (with matching
    # compute-dtype rounding when bf16 MXU inputs are used).
    xc = x.astype(compute_dtype)
    w1c = w1.astype(compute_dtype)
    w2c = w2.astype(compute_dtype)
    h = jnp.einsum("bld,od->blo", xc, w1c,
                   preferred_element_type=jnp.float32) + b1
    hc = h.astype(compute_dtype)
    y = jnp.einsum("blo,do->bld", hc, w2c,
                   preferred_element_type=jnp.float32) + b2
    return y.astype(x.dtype)


if __name__ == "__main__":
    key = jax.random.PRNGKey(0)

    # --- small test (module-implied toy shapes), f32 compute -----------------
    B, L, d_hid, d_inner = 2, 8, 32, 64
    kx, kw1, kb1, kw2, kb2, kx2 = jax.random.split(key, 6)
    x = jax.random.normal(kx, (B, L, d_hid), dtype=jnp.float32)
    w1 = jax.random.normal(kw1, (d_inner, d_hid), dtype=jnp.float32) * 0.1
    b1 = jax.random.normal(kb1, (d_inner,), dtype=jnp.float32) * 0.1
    w2 = jax.random.normal(kw2, (d_hid, d_inner), dtype=jnp.float32) * 0.1
    b2 = jax.random.normal(kb2, (d_hid,), dtype=jnp.float32) * 0.1

    params_f32 = prepare_ffn_params(w1, b1, w2, b2, compute_dtype=jnp.float32)
    out = jax.block_until_ready(positionwise_feed_forward(x, *params_f32))
    ref = reference(x, w1, b1, w2, b2, compute_dtype=jnp.float32)
    assert out.shape == (B, L, d_hid)
    assert jnp.allclose(out, ref, atol=1e-4, rtol=1e-4), "f32 mismatch vs reference"

    # --- larger test: multi-step pipelined grid, default bf16 MXU compute ----
    B2, L2, d_hid2, d_inner2 = 2, 1024, 128, 256
    x2 = jax.random.normal(kx2, (B2, L2, d_hid2), dtype=jnp.float32)
    kw1b, kb1b, kw2b, kb2b = jax.random.split(kw1, 4)
    w1b = jax.random.normal(kw1b, (d_inner2, d_hid2), dtype=jnp.float32) * 0.1
    b1b = jax.random.normal(kb1b, (d_inner2,), dtype=jnp.float32) * 0.1
    w2b = jax.random.normal(kw2b, (d_hid2, d_inner2), dtype=jnp.float32) * 0.1
    b2b = jax.random.normal(kb2b, (d_hid2,), dtype=jnp.float32) * 0.1

    params_bf16 = prepare_ffn_params(w1b, b1b, w2b, b2b)   # bf16 compute default
    out2 = jax.block_until_ready(
        positionwise_feed_forward(x2, *params_bf16, block_m=256))
    ref2 = reference(x2, w1b, b1b, w2b, b2b, compute_dtype=jnp.bfloat16)
    assert out2.shape == (B2, L2, d_hid2)
    assert jnp.allclose(out2, ref2, atol=5e-3, rtol=5e-3), "bf16 mismatch vs reference"

    # --- optional bf16 output writeback (halves output HBM traffic) ----------
    out3 = jax.block_until_ready(
        positionwise_feed_forward(x2, *params_bf16, block_m=256,
                                  out_dtype=jnp.bfloat16))
    assert out3.dtype == jnp.bfloat16
    assert jnp.allclose(out3.astype(jnp.float32), ref2, atol=5e-2, rtol=5e-2), \
        "bf16-out mismatch vs reference"

    # NOTE: the PyTorch forward never calls self.layer_norm and has no ReLU,
    # so the kernel intentionally implements only the two 1x1-conv matmuls.
    print("KERNEL_OK")
</pallas_src>

<mosaic_0001>
module attributes {stable_mosaic.version = 11 : i64} {
  func.func @_ffn_kernel(%arg0: i32, %arg1: i32, %arg2: memref<16x128xf32, #tpu.memory_space<vmem>>, %arg3: memref<128x128xf32, #tpu.memory_space<vmem>>, %arg4: memref<1x128xf32, #tpu.memory_space<vmem>>, %arg5: memref<128x128xf32, #tpu.memory_space<vmem>>, %arg6: memref<1x128xf32, #tpu.memory_space<vmem>>, %arg7: memref<16x128xf32, #tpu.memory_space<vmem>>, %arg8: memref<16x128xf32, #tpu.memory_space<vmem>>) attributes {dimension_semantics = [#tpu.dimension_semantics<parallel>, #tpu.dimension_semantics<arbitrary>], iteration_bounds = array<i64: 1, 1>, scalar_prefetch = 0 : i64, scratch_operands = 1 : i64, tpu.core_type = #tpu.core_type<tc>, window_params = [{transform_indices = @transform_0, window_bounds = array<i64: 16, 128>}, {pipeline_mode = #tpu.pipeline_mode<synchronous>, transform_indices = @transform_1, window_bounds = array<i64: 128, 128>}, {pipeline_mode = #tpu.pipeline_mode<synchronous>, transform_indices = @transform_2, window_bounds = array<i64: 1, 128>}, {pipeline_mode = #tpu.pipeline_mode<synchronous>, transform_indices = @transform_3, window_bounds = array<i64: 128, 128>}, {pipeline_mode = #tpu.pipeline_mode<synchronous>, transform_indices = @transform_4, window_bounds = array<i64: 1, 128>}, {transform_indices = @transform_5, window_bounds = array<i64: 16, 128>}]} {
    %c0 = arith.constant 0 : index
    %c0_0 = arith.constant 0 : index
    %0 = vector.load %arg2[%c0, %c0_0] : memref<16x128xf32, #tpu.memory_space<vmem>>, vector<16x128xf32>
    %c0_1 = arith.constant 0 : index
    %c0_2 = arith.constant 0 : index
    %1 = vector.load %arg3[%c0_1, %c0_2] : memref<128x128xf32, #tpu.memory_space<vmem>>, vector<128x128xf32>
    %cst = arith.constant dense<0.000000e+00> : vector<16x128xf32>
    %2 = tpu.matmul %0, %1, %cst {dimension_numbers = #tpu.dot_dimension_numbers<[1], [0], [0], [1], [0, 0, 1, 1], [], []>} : vector<16x128xf32>, vector<128x128xf32>, vector<16x128xf32> -> vector<16x128xf32>
    %c0_3 = arith.constant 0 : index
    %c0_4 = arith.constant 0 : index
    %3 = vector.load %arg4[%c0_3, %c0_4] : memref<1x128xf32, #tpu.memory_space<vmem>>, vector<1x128xf32>
    %4 = vector.broadcast %3 : vector<1x128xf32> to vector<16x128xf32>
    %5 = arith.addf %2, %4 : vector<16x128xf32>
    %c0_5 = arith.constant 0 : index
    %c0_6 = arith.constant 0 : index
    %6 = vector.load %arg5[%c0_5, %c0_6] : memref<128x128xf32, #tpu.memory_space<vmem>>, vector<128x128xf32>
    %cst_7 = arith.constant dense<0.000000e+00> : vector<16x128xf32>
    %7 = tpu.matmul %5, %6, %cst_7 {dimension_numbers = #tpu.dot_dimension_numbers<[1], [0], [0], [1], [0, 0, 1, 1], [], []>} : vector<16x128xf32>, vector<128x128xf32>, vector<16x128xf32> -> vector<16x128xf32>
    %c0_i32 = arith.constant 0 : i32
    %8 = arith.cmpi eq, %arg1, %c0_i32 : i32
    %9 = arith.extui %8 : i1 to i32
    %c0_i32_8 = arith.constant 0 : i32
    %10 = arith.cmpi ne, %9, %c0_i32_8 : i32
    scf.if %10 {
      %c0_13 = arith.constant 0 : index
      %c0_14 = arith.constant 0 : index
      %17 = vector.load %arg8[%c0_13, %c0_14] : memref<16x128xf32, #tpu.memory_space<vmem>>, vector<16x128xf32>
      tpu.vector_store %arg8[%c0_13, %c0_14], %7 {strides = array<i32>} : memref<16x128xf32, #tpu.memory_space<vmem>>, vector<16x128xf32>,
    } else {
    }
    %c0_i32_9 = arith.constant 0 : i32
    %11 = arith.cmpi sgt, %arg1, %c0_i32_9 : i32
    %12 = arith.extui %11 : i1 to i32
    %c0_i32_10 = arith.constant 0 : i32
    %13 = arith.cmpi ne, %12, %c0_i32_10 : i32
    scf.if %13 {
      %c0_13 = arith.constant 0 : index
      %c0_14 = arith.constant 0 : index
      %17 = vector.load %arg8[%c0_13, %c0_14] : memref<16x128xf32, #tpu.memory_space<vmem>>, vector<16x128xf32>
      %18 = arith.addf %17, %7 : vector<16x128xf32>
      %c0_15 = arith.constant 0 : index
      %c0_16 = arith.constant 0 : index
      %19 = vector.load %arg8[%c0_15, %c0_16] : memref<16x128xf32, #tpu.memory_space<vmem>>, vector<16x128xf32>
      tpu.vector_store %arg8[%c0_15, %c0_16], %18 {strides = array<i32>} : memref<16x128xf32, #tpu.memory_space<vmem>>, vector<16x128xf32>,
    } else {
    }
    %c0_i32_11 = arith.constant 0 : i32
    %14 = arith.cmpi eq, %arg1, %c0_i32_11 : i32
    %15 = arith.extui %14 : i1 to i32
    %c0_i32_12 = arith.constant 0 : i32
    %16 = arith.cmpi ne, %15, %c0_i32_12 : i32
    scf.if %16 {
      %c0_13 = arith.constant 0 : index
      %c0_14 = arith.constant 0 : index
      %17 = vector.load %arg8[%c0_13, %c0_14] : memref<16x128xf32, #tpu.memory_space<vmem>>, vector<16x128xf32>
      %c0_15 = arith.constant 0 : index
      %c0_16 = arith.constant 0 : index
      %18 = vector.load %arg6[%c0_15, %c0_16] : memref<1x128xf32, #tpu.memory_space<vmem>>, vector<1x128xf32>
      %19 = vector.broadcast %18 : vector<1x128xf32> to vector<16x128xf32>
      %20 = arith.addf %17, %19 : vector<16x128xf32>
      %c0_17 = arith.constant 0 : index
      %c0_18 = arith.constant 0 : index
      %21 = vector.load %arg7[%c0_17, %c0_18] : memref<16x128xf32, #tpu.memory_space<vmem>>, vector<16x128xf32>
      tpu.vector_store %arg7[%c0_17, %c0_18], %20 {strides = array<i32>} : memref<16x128xf32, #tpu.memory_space<vmem>>, vector<16x128xf32>,
    } else {
    }
    return
  }
  func.func @transform_0(%arg0: i32, %arg1: i32) -> (i32, i32) {
    %c0_i32 = arith.constant 0 : i32
    %c0_i32_0 = arith.constant 0 : i32
    return %arg0, %c0_i32 : i32, i32
  }
  func.func @transform_1(%arg0: i32, %arg1: i32) -> (i32, i32) {
    %c0_i32 = arith.constant 0 : i32
    %c0_i32_0 = arith.constant 0 : i32
    return %c0_i32, %arg1 : i32, i32
  }
  func.func @transform_2(%arg0: i32, %arg1: i32) -> (i32, i32) {
    %c0_i32 = arith.constant 0 : i32
    %c0_i32_0 = arith.constant 0 : i32
    return %c0_i32, %arg1 : i32, i32
  }
  func.func @transform_3(%arg0: i32, %arg1: i32) -> (i32, i32) {
    %c0_i32 = arith.constant 0 : i32
    %c0_i32_0 = arith.constant 0 : i32
    return %arg1, %c0_i32 : i32, i32
  }
  func.func @transform_4(%arg0: i32, %arg1: i32) -> (i32, i32) {
    %c0_i32 = arith.constant 0 : i32
    %c0_i32_0 = arith.constant 0 : i32
    %c0_i32_1 = arith.constant 0 : i32
    return %c0_i32, %c0_i32_0 : i32, i32
  }
  func.func @transform_5(%arg0: i32, %arg1: i32) -> (i32, i32) {
    %c0_i32 = arith.constant 0 : i32
    %c0_i32_0 = arith.constant 0 : i32
    return %arg0, %c0_i32 : i32, i32
  }
}

</mosaic_0001>

<llo_original>
// kernel: positionwise_feed_forward.1
$region0: #{positionwise_feed_forward.1}
  #allocation0 [shape = 'u32[]', space=smem, size = 0x4, offset = 0x4, fixed_abs, tag = 'smem constant byte address 0x4 - core index']
  #allocation1 [shape = 'u32[144,128]{1,0:T(1,128)}', space=vmem, size = 0x12000, scoped, tag = 'internal scratch']
  #allocation2 [shape = 'f32[16,128]{1,0:T(8,128)}', space=vmem, size = 0x2000, scoped, tag = 'scratch operand']
  %s0 = inlined_call_operand.vmem [shape: f32[16,128], index: 0, kind: input, shape index: {}]
  %s1 = inlined_call_operand.hbm [shape: f32[128,128], index: 1, kind: input, shape index: {}]
  %s2 = inlined_call_operand.vmem [shape: f32[1,128], index: 2, kind: input, shape index: {}]
  %s3 = inlined_call_operand.hbm [shape: f32[128,128], index: 3, kind: input, shape index: {}]
  %s4 = inlined_call_operand.vmem [shape: f32[1,128], index: 4, kind: input, shape index: {}]
  %s5 = inlined_call_operand.vmem [shape: f32[16,128], index: 5, kind: output, shape index: {}]
  %s6 = sld [smem:[#allocation0]]
  $region50: #{positionwise_feed_forward.1} parent=0
    _
  %s8 = ssub.s32 1, %s6
  %s9 = scalar_select 0, %s8, %s6
  $region1: #{positionwise_feed_forward.1} parent=0
    #allocation3 [shape = 'u8[65536]{0}', space=vmem, size = 0x10000, scoped, tag = 'input window, operand 1, single buffered']
    #allocation4 [shape = 's32[1]{0}', space=sflag, size = 0x4, scoped, tag = 'scoped memory for positionwise_feed_forward.1']
    #allocation5 [shape = 'u8[65536]{0}', space=vmem, size = 0x10000, scoped, tag = 'input window, operand 3, single buffered']
    #allocation6 [shape = 's32[1]{0}', space=sflag, size = 0x4, scoped, tag = 'scoped memory for positionwise_feed_forward.1']
    %10 = vsyncpa [#allocation4], 0
    %11 = vsyncpa [#allocation6], 0
    // Predicated region
    $region2: #{positionwise_feed_forward.1} parent=1 // pred_check
      _
    $region3: #{positionwise_feed_forward.1} parent=1 // pred_check_branch
      %13 = sbr.rel (0) target = $region5
    $region4: #{positionwise_feed_forward.1} parent=1 // pred_region
      _
    $region5: #{positionwise_feed_forward.1} parent=1 // pred_fallthru
      _
    // Predicated region
    $region6: #{positionwise_feed_forward.1} parent=1 // pred_check
      _
    $region7: #{positionwise_feed_forward.1} parent=1 // pred_check_branch
      %15 = sbr.rel (0) target = $region9
    $region8: #{positionwise_feed_forward.1} parent=1 // pred_region
      %s17 = ssub.s32 2048, 2048
      %18 = vsyncadd [#allocation4], %s17
      %s19 = sshll.u32 [#allocation3], 4
      %s20 = int_to_ptr.vmem [resolvable:$true] %s19
      %25 = dma.hbm_to_vmem [thread:$0]  %s1, 2048, %s20, [#allocation4], 128, 128, 8
    $region9: #{positionwise_feed_forward.1} parent=1 // pred_fallthru
      _
    // Predicated region
    $region10: #{positionwise_feed_forward.1} parent=1 // pred_check
      _
    $region11: #{positionwise_feed_forward.1} parent=1 // pred_check_branch
      %27 = sbr.rel (0) target = $region13
    $region12: #{positionwise_feed_forward.1} parent=1 // pred_region
      _
    $region13: #{positionwise_feed_forward.1} parent=1 // pred_fallthru
      _
    // Predicated region
    $region14: #{positionwise_feed_forward.1} parent=1 // pred_check
      _
    $region15: #{positionwise_feed_forward.1} parent=1 // pred_check_branch
      %29 = sbr.rel (0) target = $region17
    $region16: #{positionwise_feed_forward.1} parent=1 // pred_region
      %s31 = ssub.s32 2048, 2048
      %32 = vsyncadd [#allocation6], %s31
      %s33 = sshll.u32 [#allocation5], 4
      %s34 = int_to_ptr.vmem [resolvable:$true] %s33
      %39 = dma.hbm_to_vmem [thread:$0]  %s3, 2048, %s34, [#allocation6], 128, 128, 8
    $region17: #{positionwise_feed_forward.1} parent=1 // pred_fallthru
      _
    // Predicated region
    $region18: #{positionwise_feed_forward.1} parent=1 // pred_check
      _
    $region19: #{positionwise_feed_forward.1} parent=1 // pred_check_branch
      %41 = sbr.rel (0) target = $region21
    $region20: #{positionwise_feed_forward.1} parent=1 // pred_region
      _
    $region21: #{positionwise_feed_forward.1} parent=1 // pred_fallthru
      _
    // Predicated region
    $region22: #{positionwise_feed_forward.1} parent=1 // pred_check
      _
    $region23: #{positionwise_feed_forward.1} parent=1 // pred_check_branch
      %43 = sbr.rel (0) target = $region25
    $region24: #{positionwise_feed_forward.1} parent=1 // pred_region
      %44 = dma.done [#allocation4], 2048
    $region25: #{positionwise_feed_forward.1} parent=1 // pred_fallthru
      _
    // Predicated region
    $region26: #{positionwise_feed_forward.1} parent=1 // pred_check
      _
    $region27: #{positionwise_feed_forward.1} parent=1 // pred_check_branch
      %46 = sbr.rel (0) target = $region29
    $region28: #{positionwise_feed_forward.1} parent=1 // pred_region
      %47 = dma.done [#allocation6], 2048
    $region29: #{positionwise_feed_forward.1} parent=1 // pred_fallthru
      _
    %v48 = vld [vmem:[%s0] sm:$0xff]
    %v49 = vld [vmem:[%s0 + $0x8] sm:$0xff]
    %v50 = vld [vmem:[#allocation3] sm:$0xff]
    %v51 = vld [vmem:[#allocation3 + $0x8] sm:$0xff]
    %v52 = vld [vmem:[#allocation3 + $0x10] sm:$0xff]
    %v53 = vld [vmem:[#allocation3 + $0x18] sm:$0xff]
    %v54 = vld [vmem:[#allocation3 + $0x20] sm:$0xff]
    %v55 = vld [vmem:[#allocation3 + $0x28] sm:$0xff]
    %v56 = vld [vmem:[#allocation3 + $0x30] sm:$0xff]
    %v57 = vld [vmem:[#allocation3 + $0x38] sm:$0xff]
    %v58 = vld [vmem:[#allocation3 + $0x40] sm:$0xff]
    %v59 = vld [vmem:[#allocation3 + $0x48] sm:$0xff]
    %v60 = vld [vmem:[#allocation3 + $0x50] sm:$0xff]
    %v61 = vld [vmem:[#allocation3 + $0x58] sm:$0xff]
    %v62 = vld [vmem:[#allocation3 + $0x60] sm:$0xff]
    %v63 = vld [vmem:[#allocation3 + $0x68] sm:$0xff]
    %v64 = vld [vmem:[#allocation3 + $0x70] sm:$0xff]
    %v65 = vld [vmem:[#allocation3 + $0x78] sm:$0xff]
    %v66 = vld [vmem:[%s2] sm:$0x1]
    %v68 = vlaneseq
    %v69 = vshrl.u32 %v68, 7
    %v70 = vsub.s32 0, %v69
    %v71 = vrot.slane %v66, %v70
    %73 = vmatprep.subr.mxu0 0.0
    %74 = vmatpush1.msra.mxu0 %v50
    %75 = vmatprep.subr.mxu0 0.0
    %76 = vmatpush1.msra.mxu0 %v51
    %77 = vmatprep.subr.mxu0 0.0
    %78 = vmatpush1.msra.mxu0 %v52
    %79 = vmatprep.subr.mxu0 0.0
    %80 = vmatpush1.msra.mxu0 %v53
    %81 = vmatprep.subr.mxu0 0.0
    %82 = vmatpush1.msra.mxu0 %v54
    %83 = vmatprep.subr.mxu0 0.0
    %84 = vmatpush1.msra.mxu0 %v55
    %85 = vmatprep.subr.mxu0 0.0
    %86 = vmatpush1.msra.mxu0 %v56
    %87 = vmatprep.subr.mxu0 0.0
    %88 = vmatpush1.msra.mxu0 %v57
    %89 = vmatprep.subr.mxu0 0.0
    %90 = vmatpush1.msra.mxu0 %v58
    %91 = vmatprep.subr.mxu0 0.0
    %92 = vmatpush1.msra.mxu0 %v59
    %93 = vmatprep.subr.mxu0 0.0
    %94 = vmatpush1.msra.mxu0 %v60
    %95 = vmatprep.subr.mxu0 0.0
    %96 = vmatpush1.msra.mxu0 %v61
    %97 = vmatprep.subr.mxu0 0.0
    %98 = vmatpush1.msra.mxu0 %v62
    %99 = vmatprep.subr.mxu0 0.0
    %100 = vmatpush1.msra.mxu0 %v63
    %101 = vmatprep.subr.mxu0 0.0
    %102 = vmatpush1.msra.mxu0 %v64
    %103 = vmatprep.subr.mxu0 0.0
    %104 = vmatpush1.msra.mxu0 %v65
    %105 = vmatprep.subr.mxu0 0.0
    %106 = vmatpush1.msra.mxu0 0.0
    %107 = vmatprep.subr.mxu0 0.0
    %108 = vmatpush1.msra.mxu0 0.0
    %109 = vmatprep.subr.mxu0 0.0
    %110 = vmatpush1.msra.mxu0 0.0
    %111 = vmatprep.subr.mxu0 0.0
    %112 = vmatpush1.msra.mxu0 0.0
    %113 = vmatprep.subr.mxu0 0.0
    %114 = vmatpush1.msra.mxu0 0.0
    %115 = vmatprep.subr.mxu0 0.0
    %116 = vmatpush1.msra.mxu0 0.0
    %117 = vmatprep.subr.mxu0 0.0
    %118 = vmatpush1.msra.mxu0 0.0
    %119 = vmatprep.subr.mxu0 0.0
    %120 = vmatpush1.msra.mxu0 0.0
    %121 = vmatprep.subr.mxu0 0.0
    %122 = vmatpush1.msra.mxu0 0.0
    %123 = vmatprep.subr.mxu0 0.0
    %124 = vmatpush1.msra.mxu0 0.0
    %125 = vmatprep.subr.mxu0 0.0
    %126 = vmatpush1.msra.mxu0 0.0
    %127 = vmatprep.subr.mxu0 0.0
    %128 = vmatpush1.msra.mxu0 0.0
    %129 = vmatprep.subr.mxu0 0.0
    %130 = vmatpush1.msra.mxu0 0.0
    %131 = vmatprep.subr.mxu0 0.0
    %132 = vmatpush1.msra.mxu0 0.0
    %133 = vmatprep.subr.mxu0 0.0
    %134 = vmatpush1.msra.mxu0 0.0
    %135 = vmatprep.subr.mxu0 0.0
    %136 = vmatpush1.msra.mxu0 0.0
    %137 = vmatprep.mubr.f32.mxu0 0.0
    %138 = vmatmul.mubr.f32.gmra.mrb[0].mxu0 %v48
    %v139 = vpop.f32.mrb[0].mxu0
    %v140 = vadd.f32 %v71, %v139
    %v141 = vpop.f32.mrb[0].mxu0
    %142 = vmatprep.mubr.f32.mxu0 0.0
    %143 = vmatmul.mubr.f32.gmra.mrb[0].mxu0 %v49
    %v144 = vpop.f32.mrb[0].mxu0
    %v145 = vadd.f32 %v71, %v144
    %v146 = vpop.f32.mrb[0].mxu0
    %147 = vdwg.mxu0
    %v148 = vld [vmem:[#allocation5] sm:$0xff]
    %v149 = vld [vmem:[#allocation5 + $0x8] sm:$0xff]
    %v150 = vld [vmem:[#allocation5 + $0x10] sm:$0xff]
    %v151 = vld [vmem:[#allocation5 + $0x18] sm:$0xff]
    %v152 = vld [vmem:[#allocation5 + $0x20] sm:$0xff]
    %v153 = vld [vmem:[#allocation5 + $0x28] sm:$0xff]
    %v154 = vld [vmem:[#allocation5 + $0x30] sm:$0xff]
    %v155 = vld [vmem:[#allocation5 + $0x38] sm:$0xff]
    %v156 = vld [vmem:[#allocation5 + $0x40] sm:$0xff]
    %v157 = vld [vmem:[#allocation5 + $0x48] sm:$0xff]
    %v158 = vld [vmem:[#allocation5 + $0x50] sm:$0xff]
    %v159 = vld [vmem:[#allocation5 + $0x58] sm:$0xff]
    %v160 = vld [vmem:[#allocation5 + $0x60] sm:$0xff]
    %v161 = vld [vmem:[#allocation5 + $0x68] sm:$0xff]
    %v162 = vld [vmem:[#allocation5 + $0x70] sm:$0xff]
    %v163 = vld [vmem:[#allocation5 + $0x78] sm:$0xff]
    %164 = vmatprep.subr.mxu0 0.0
    %165 = vmatpush1.msra.mxu0 %v148
    %166 = vmatprep.subr.mxu0 0.0
    %167 = vmatpush1.msra.mxu0 %v149
    %168 = vmatprep.subr.mxu0 0.0
    %169 = vmatpush1.msra.mxu0 %v150
    %170 = vmatprep.subr.mxu0 0.0
    %171 = vmatpush1.msra.mxu0 %v151
    %172 = vmatprep.subr.mxu0 0.0
    %173 = vmatpush1.msra.mxu0 %v152
    %174 = vmatprep.subr.mxu0 0.0
    %175 = vmatpush1.msra.mxu0 %v153
    %176 = vmatprep.subr.mxu0 0.0
    %177 = vmatpush1.msra.mxu0 %v154
    %178 = vmatprep.subr.mxu0 0.0
    %179 = vmatpush1.msra.mxu0 %v155
    %180 = vmatprep.subr.mxu0 0.0
    %181 = vmatpush1.msra.mxu0 %v156
    %182 = vmatprep.subr.mxu0 0.0
    %183 = vmatpush1.msra.mxu0 %v157
    %184 = vmatprep.subr.mxu0 0.0
    %185 = vmatpush1.msra.mxu0 %v158
    %186 = vmatprep.subr.mxu0 0.0
    %187 = vmatpush1.msra.mxu0 %v159
    %188 = vmatprep.subr.mxu0 0.0
    %189 = vmatpush1.msra.mxu0 %v160
    %190 = vmatprep.subr.mxu0 0.0
    %191 = vmatpush1.msra.mxu0 %v161
    %192 = vmatprep.subr.mxu0 0.0
    %193 = vmatpush1.msra.mxu0 %v162
    %194 = vmatprep.subr.mxu0 0.0
    %195 = vmatpush1.msra.mxu0 %v163
    %196 = vmatprep.subr.mxu0 0.0
    %197 = vmatpush1.msra.mxu0 0.0
    %198 = vmatprep.subr.mxu0 0.0
    %199 = vmatpush1.msra.mxu0 0.0
    %200 = vmatprep.subr.mxu0 0.0
    %201 = vmatpush1.msra.mxu0 0.0
    %202 = vmatprep.subr.mxu0 0.0
    %203 = vmatpush1.msra.mxu0 0.0
    %204 = vmatprep.subr.mxu0 0.0
    %205 = vmatpush1.msra.mxu0 0.0
    %206 = vmatprep.subr.mxu0 0.0
    %207 = vmatpush1.msra.mxu0 0.0
    %208 = vmatprep.subr.mxu0 0.0
    %209 = vmatpush1.msra.mxu0 0.0
    %210 = vmatprep.subr.mxu0 0.0
    %211 = vmatpush1.msra.mxu0 0.0
    %212 = vmatprep.subr.mxu0 0.0
    %213 = vmatpush1.msra.mxu0 0.0
    %214 = vmatprep.subr.mxu0 0.0
    %215 = vmatpush1.msra.mxu0 0.0
    %216 = vmatprep.subr.mxu0 0.0
    %217 = vmatpush1.msra.mxu0 0.0
    %218 = vmatprep.subr.mxu0 0.0
    %219 = vmatpush1.msra.mxu0 0.0
    %220 = vmatprep.subr.mxu0 0.0
    %221 = vmatpush1.msra.mxu0 0.0
    %222 = vmatprep.subr.mxu0 0.0
    %223 = vmatpush1.msra.mxu0 0.0
    %224 = vmatprep.subr.mxu0 0.0
    %225 = vmatpush1.msra.mxu0 0.0
    %226 = vmatprep.subr.mxu0 0.0
    %227 = vmatpush1.msra.mxu0 0.0
    %228 = vmatprep.mubr.f32.mxu0 0.0
    %229 = vmatmul.mubr.f32.gmra.mrb[0].mxu0 %v140
    %v230 = vpop.f32.mrb[0].mxu0
    %v231 = vadd.f32 0.0, %v230
    %v232 = vpop.f32.mrb[0].mxu0
    %233 = vmatprep.mubr.f32.mxu0 0.0
    %234 = vmatmul.mubr.f32.gmra.mrb[0].mxu0 %v145
    %v235 = vpop.f32.mrb[0].mxu0
    %v236 = vadd.f32 0.0, %v235
    %v237 = vpop.f32.mrb[0].mxu0
    %238 = vdwg.mxu0
    %p239 = scmp.eq.s32.totalorder 0, 0
    // Predicated region
    $region30: #{positionwise_feed_forward.1} parent=1 // pred_check
      %p240 = pneg %p239
    $region31: #{positionwise_feed_forward.1} parent=1 // pred_check_branch
      %242 = sbr.rel (%p240) target = $region33
    $region32: #{positionwise_feed_forward.1} parent=1 // pred_region
      %243 = vst [vmem:[#allocation2] sm:$0xff] %v231
      %244 = vst [vmem:[#allocation2 + $0x8] sm:$0xff] %v236
    $region33: #{positionwise_feed_forward.1} parent=1 // pred_fallthru
      _
    %p245 = scmp.gt.s32.totalorder 0, 0
    // Predicated region
    $region34: #{positionwise_feed_forward.1} parent=1 // pred_check
      %p246 = pneg %p245
    $region35: #{positionwise_feed_forward.1} parent=1 // pred_check_branch
      %248 = sbr.rel (%p246) target = $region37
    $region36: #{positionwise_feed_forward.1} parent=1 // pred_region
      %v249 = vld [vmem:[#allocation2] sm:$0xff]
      %v250 = vld [vmem:[#allocation2 + $0x8] sm:$0xff]
      %v251 = vadd.f32 %v249, %v231
      %v252 = vadd.f32 %v250, %v236
      %253 = vst [vmem:[#allocation2] sm:$0xff] %v251
      %254 = vst [vmem:[#allocation2 + $0x8] sm:$0xff] %v252
    $region37: #{positionwise_feed_forward.1} parent=1 // pred_fallthru
      _
    // Predicated region
    $region38: #{positionwise_feed_forward.1} parent=1 // pred_check
      %p255 = pneg %p239
    $region39: #{positionwise_feed_forward.1} parent=1 // pred_check_branch
      %257 = sbr.rel (%p255) target = $region41
    $region40: #{positionwise_feed_forward.1} parent=1 // pred_region
      %v258 = vld [vmem:[#allocation2] sm:$0xff]
      %v259 = vld [vmem:[#allocation2 + $0x8] sm:$0xff]
      %v260 = vld [vmem:[%s4] sm:$0x1]
      %v262 = vlaneseq
      %v263 = vshrl.u32 %v262, 7
      %v264 = vsub.s32 0, %v263
      %v265 = vrot.slane %v260, %v264
      %v267 = vadd.f32 %v258, %v265
      %v268 = vadd.f32 %v259, %v265
      %269 = vst [vmem:[%s5] sm:$0xff] %v267
      %270 = vst [vmem:[%s5 + $0x8] sm:$0xff] %v268
    $region41: #{positionwise_feed_forward.1} parent=1 // pred_fallthru
      _
    // Predicated region
    $region42: #{positionwise_feed_forward.1} parent=1 // pred_check
      _
    $region43: #{positionwise_feed_forward.1} parent=1 // pred_check_branch
      %272 = sbr.rel (0) target = $region45
    $region44: #{positionwise_feed_forward.1} parent=1 // pred_region
      _
    $region45: #{positionwise_feed_forward.1} parent=1 // pred_fallthru
      _
    // Predicated region
    $region46: #{positionwise_feed_forward.1} parent=1 // pred_check
      _
    $region47: #{positionwise_feed_forward.1} parent=1 // pred_check_branch
      %274 = sbr.rel (0) target = $region49
    $region48: #{positionwise_feed_forward.1} parent=1 // pred_region
      _
    $region49: #{positionwise_feed_forward.1} parent=1 // pred_fallthru
      _
    %275 = vsyncpa [#allocation4], 1
    %276 = vsyncpa [#allocation6], 1

</llo_original>
